<compile_context>
chip_gen: v6e
topology: v6e:2x2x1
jax: 0.10.0
libtpu: 0.0.40
codegen_flags: <defaults>
</compile_context>

<pallas_src>
import jax
import jax.numpy as jnp
from jax.experimental import pallas as pl
from jax.experimental.pallas import tpu as pltpu

NOISE_DIM = 10
OUTPUT_DIM = 5
HIDDEN = (128, 256, 256, 128)
LN_EPS = 1e-5
NEG_SLOPE = 0.2

NOISE_PAD = 16         # pad K=10 -> 16 (sublane-aligned first-layer operand)
OUT_PAD = 128          # pad 5 -> 128 (lane-dense, unmasked output stores)
VEC_W = 256            # common lane width for the packed bias/gamma/beta rows
MAX_BATCH_TILE = 1024  # rows per grid step (amortizes ~0.35us/step overhead)


def _round_up(x, m):
    return (x + m - 1) // m * m


def _cdiv(a, b):
    return -(-a // b)


def _tile_plan(batch):
    """Pick (tile, padded_batch, halves) minimizing padding.

    n_steps is forced even (>= 2) so the parallel batch axis balances across
    v7x's two TensorCores; tile only needs to be a multiple of 8 (f32
    sublanes).  If tile >= 16 it is rounded to 16 so the kernel can split it
    into two independent halves for MXU/VPU overlap.
    """
    n_steps = max(2, _cdiv(batch, MAX_BATCH_TILE))
    n_steps = 2 * _cdiv(n_steps, 2)
    tile = _round_up(_cdiv(batch, n_steps), 8)
    if tile >= 16:
        tile = _round_up(tile, 16)
        halves = ((0, tile // 2), (tile // 2, tile // 2))
    else:
        halves = ((0, tile),)
    padded = _round_up(batch, tile)
    return tile, padded, halves


def _ln_lrelu_block(x_bf16, w_ref, b, g, beta):
    """bf16 matmul (f32 acc) -> LayerNorm (f32) -> LeakyReLU(0.2) -> bf16."""
    h = jnp.dot(x_bf16, w_ref[...], preferred_element_type=jnp.float32) + b
    mu = jnp.mean(h, axis=-1, keepdims=True)
    m2 = jnp.mean(h * h, axis=-1, keepdims=True)
    inv = jax.lax.rsqrt(m2 - mu * mu + LN_EPS)      # var = E[h^2] - mu^2
    hn = (h - mu) * inv * g + beta
    y = jnp.where(hn > 0, hn, NEG_SLOPE * hn)
    return y.astype(jnp.bfloat16)


def make_generator_kernel(halves):
    """Kernel factory; `halves` is a static tuple of (row_offset, rows)."""

    def kernel(z_ref, w1, w2, w3, w4, w5, vec_ref, o_ref):
        # Packed (13, 256) f32 vector table; static slices are cheap loads.
        b1, g1, be1 = (vec_ref[r:r + 1, :HIDDEN[0]] for r in (0, 1, 2))
        b2, g2, be2 = (vec_ref[r:r + 1, :HIDDEN[1]] for r in (3, 4, 5))
        b3, g3, be3 = (vec_ref[r:r + 1, :HIDDEN[2]] for r in (6, 7, 8))
        b4, g4, be4 = (vec_ref[r:r + 1, :HIDDEN[3]] for r in (9, 10, 11))
        b5 = vec_ref[12:13, :OUT_PAD]

        layers = ((w1, b1, g1, be1), (w2, b2, g2, be2),
                  (w3, b3, g3, be3), (w4, b4, g4, be4))

        # Two independent half-tiles: no data deps between them, so the LLO
        # scheduler overlaps one half's MXU matmul with the other half's
        # LayerNorm / LeakyReLU (VPU/XLU/EUP).
        xs = [z_ref[lo:lo + sz, :].astype(jnp.bfloat16) for (lo, sz) in halves]
        for (w, b, g, beta) in layers:
            xs = [_ln_lrelu_block(x, w, b, g, beta) for x in xs]
        for (lo, sz), x in zip(halves, xs):
            o_ref[lo:lo + sz, :] = (
                jnp.dot(x, w5[...], preferred_element_type=jnp.float32) + b5)

    return kernel


def prepare_params(params):
    """One-time padding / packing / bf16 cast of the weights (call once)."""
    (w1, b1, g1, be1, w2, b2, g2, be2, w3, b3, g3, be3,
     w4, b4, g4, be4, w5, b5) = params

    w1_p = jnp.zeros((NOISE_PAD, HIDDEN[0]), jnp.float32).at[:NOISE_DIM, :].set(w1)
    w5_p = jnp.zeros((HIDDEN[3], OUT_PAD), jnp.float32).at[:, :OUTPUT_DIM].set(w5)
    b5_p = jnp.zeros((1, OUT_PAD), jnp.float32).at[:, :OUTPUT_DIM].set(b5)

    weights = tuple(w.astype(jnp.bfloat16) for w in (w1_p, w2, w3, w4, w5_p))

    vec_rows = (b1, g1, be1, b2, g2, be2, b3, g3, be3, b4, g4, be4, b5_p)
    vecs = jnp.zeros((len(vec_rows), VEC_W), jnp.float32)
    for i, v in enumerate(vec_rows):
        vecs = vecs.at[i, :v.shape[1]].set(v[0])

    return weights + (vecs,)


@jax.jit
def generator_forward(z, kernel_params):
    """z: (B, NOISE_DIM) float32; kernel_params: output of prepare_params."""
    batch = z.shape[0]
    tile, padded, halves = _tile_plan(batch)

    # Zero-pad input: batch rows -> padded, noise dim 10 -> 16.
    z_p = jnp.zeros((padded, NOISE_PAD), jnp.float32)
    z_p = z_p.at[:batch, :NOISE_DIM].set(z.astype(jnp.float32))

    w1, w2, w3, w4, w5, vecs = kernel_params

    in_specs = [pl.BlockSpec((tile, NOISE_PAD), lambda i: (i, 0))]
    for p in (w1, w2, w3, w4, w5, vecs):
        # Whole-array block, same block index every step -> VMEM-resident.
        in_specs.append(pl.BlockSpec(p.shape, lambda i: (0, 0)))
    out_spec = pl.BlockSpec((tile, OUT_PAD), lambda i: (i, 0))

    out = pl.pallas_call(
        make_generator_kernel(halves),
        out_shape=jax.ShapeDtypeStruct((padded, OUT_PAD), jnp.float32),
        grid_spec=pltpu.PrefetchScalarGridSpec(
            num_scalar_prefetch=0,
            grid=(padded // tile,),
            in_specs=in_specs,
            out_specs=out_spec,
        ),
        compiler_params=pltpu.CompilerParams(
            dimension_semantics=("parallel",)),
    )(z_p, w1, w2, w3, w4, w5, vecs)

    # Strip batch padding and the lane-dense output padding.
    return out[:batch, :OUTPUT_DIM]


def init_params(key):
    """Parameters with the PyTorch module's shapes.

    Linear weights already transposed to (in, out); biases and LayerNorm
    gamma/beta as (1, dim) rows.
    """
    dims = (NOISE_DIM,) + HIDDEN + (OUTPUT_DIM,)
    params = []
    keys = jax.random.split(key, len(dims) - 1)
    for li in range(len(dims) - 1):
        fan_in, fan_out = dims[li], dims[li + 1]
        bound = 1.0 / jnp.sqrt(fan_in)
        wk, bk = jax.random.split(keys[li])
        w = jax.random.uniform(wk, (fan_in, fan_out), jnp.float32, -bound, bound)
        b = jax.random.uniform(bk, (1, fan_out), jnp.float32, -bound, bound)
        params.append(w)
        params.append(b)
        if li < len(dims) - 2:  # hidden layers have LayerNorm + LeakyReLU
            params.append(jnp.ones((1, fan_out), jnp.float32))   # gamma
            params.append(jnp.zeros((1, fan_out), jnp.float32))  # beta
    return tuple(params)


def reference_forward(z, params):
    """Pure-JAX f32 reference of the same forward pass."""
    idx = 0
    x = z
    for _ in range(4):
        w, b, g, beta = params[idx], params[idx + 1], params[idx + 2], params[idx + 3]
        idx += 4
        h = x @ w + b
        mu = h.mean(-1, keepdims=True)
        var = ((h - mu) ** 2).mean(-1, keepdims=True)
        hn = (h - mu) / jnp.sqrt(var + LN_EPS) * g + beta
        x = jnp.where(hn > 0, hn, NEG_SLOPE * hn)
    w, b = params[idx], params[idx + 1]
    return x @ w + b


if __name__ == "__main__":
    key = jax.random.PRNGKey(0)
    pkey, zkey1, zkey2 = jax.random.split(key, 3)
    params = init_params(pkey)
    kernel_params = prepare_params(params)   # pad / pack / bf16-cast once

    # bf16 matmuls (f32 accumulation) vs f32 reference -> ~1e-2 accuracy.
    TOL = 5e-2

    # Small deterministic batch (two 8-row grid steps).
    B1 = 16
    z1 = jax.random.normal(zkey1, (B1, NOISE_DIM), jnp.float32)
    out1 = jax.block_until_ready(generator_forward(z1, kernel_params))
    ref1 = reference_forward(z1, params)
    assert out1.shape == (B1, OUTPUT_DIM)
    assert jnp.allclose(out1, ref1, atol=TOL, rtol=TOL), "mismatch vs reference (B=16)"

    # Larger batch exercising the low-padding tiled path + two-half interleave.
    B2 = 1030
    z2 = jax.random.normal(zkey2, (B2, NOISE_DIM), jnp.float32)
    out2 = jax.block_until_ready(generator_forward(z2, kernel_params))
    ref2 = reference_forward(z2, params)
    assert out2.shape == (B2, OUTPUT_DIM)
    assert jnp.allclose(out2, ref2, atol=TOL, rtol=TOL), "mismatch vs reference (B=1030)"

    print("KERNEL_OK")
</pallas_src>

<mosaic_0001>
module attributes {stable_mosaic.version = 11 : i64} {
  func.func @kernel(%arg0: i32, %arg1: memref<8x16xf32, #tpu.memory_space<vmem>>, %arg2: memref<16x128xbf16, #tpu.memory_space<vmem>>, %arg3: memref<128x256xbf16, #tpu.memory_space<vmem>>, %arg4: memref<256x256xbf16, #tpu.memory_space<vmem>>, %arg5: memref<256x128xbf16, #tpu.memory_space<vmem>>, %arg6: memref<128x128xbf16, #tpu.memory_space<vmem>>, %arg7: memref<13x256xf32, #tpu.memory_space<vmem>>, %arg8: memref<8x128xf32, #tpu.memory_space<vmem>>) attributes {dimension_semantics = [#tpu.dimension_semantics<parallel>], iteration_bounds = array<i64: 2>, scalar_prefetch = 0 : i64, scratch_operands = 0 : i64, tpu.core_type = #tpu.core_type<tc>, window_params = [{transform_indices = @transform_0, window_bounds = array<i64: 8, 16>}, {pipeline_mode = #tpu.pipeline_mode<synchronous>, transform_indices = @transform_1, window_bounds = array<i64: 16, 128>}, {pipeline_mode = #tpu.pipeline_mode<synchronous>, transform_indices = @transform_2, window_bounds = array<i64: 128, 256>}, {pipeline_mode = #tpu.pipeline_mode<synchronous>, transform_indices = @transform_3, window_bounds = array<i64: 256, 256>}, {pipeline_mode = #tpu.pipeline_mode<synchronous>, transform_indices = @transform_4, window_bounds = array<i64: 256, 128>}, {pipeline_mode = #tpu.pipeline_mode<synchronous>, transform_indices = @transform_5, window_bounds = array<i64: 128, 128>}, {pipeline_mode = #tpu.pipeline_mode<synchronous>, transform_indices = @transform_6, window_bounds = array<i64: 13, 256>}, {transform_indices = @transform_7, window_bounds = array<i64: 8, 128>}]} {
    %c0 = arith.constant 0 : index
    %c0_0 = arith.constant 0 : index
    %0 = vector.load %arg7[%c0, %c0_0] : memref<13x256xf32, #tpu.memory_space<vmem>>, vector<1x128xf32>
    %c1 = arith.constant 1 : index
    %c0_1 = arith.constant 0 : index
    %1 = vector.load %arg7[%c1, %c0_1] : memref<13x256xf32, #tpu.memory_space<vmem>>, vector<1x128xf32>
    %c2 = arith.constant 2 : index
    %c0_2 = arith.constant 0 : index
    %2 = vector.load %arg7[%c2, %c0_2] : memref<13x256xf32, #tpu.memory_space<vmem>>, vector<1x128xf32>
    %c3 = arith.constant 3 : index
    %c0_3 = arith.constant 0 : index
    %3 = vector.load %arg7[%c3, %c0_3] : memref<13x256xf32, #tpu.memory_space<vmem>>, vector<1x256xf32>
    %c4 = arith.constant 4 : index
    %c0_4 = arith.constant 0 : index
    %4 = vector.load %arg7[%c4, %c0_4] : memref<13x256xf32, #tpu.memory_space<vmem>>, vector<1x256xf32>
    %c5 = arith.constant 5 : index
    %c0_5 = arith.constant 0 : index
    %5 = vector.load %arg7[%c5, %c0_5] : memref<13x256xf32, #tpu.memory_space<vmem>>, vector<1x256xf32>
    %c6 = arith.constant 6 : index
    %c0_6 = arith.constant 0 : index
    %6 = vector.load %arg7[%c6, %c0_6] : memref<13x256xf32, #tpu.memory_space<vmem>>, vector<1x256xf32>
    %c7 = arith.constant 7 : index
    %c0_7 = arith.constant 0 : index
    %7 = vector.load %arg7[%c7, %c0_7] : memref<13x256xf32, #tpu.memory_space<vmem>>, vector<1x256xf32>
    %c8 = arith.constant 8 : index
    %c0_8 = arith.constant 0 : index
    %8 = vector.load %arg7[%c8, %c0_8] : memref<13x256xf32, #tpu.memory_space<vmem>>, vector<1x256xf32>
    %c9 = arith.constant 9 : index
    %c0_9 = arith.constant 0 : index
    %9 = vector.load %arg7[%c9, %c0_9] : memref<13x256xf32, #tpu.memory_space<vmem>>, vector<1x128xf32>
    %c10 = arith.constant 10 : index
    %c0_10 = arith.constant 0 : index
    %10 = vector.load %arg7[%c10, %c0_10] : memref<13x256xf32, #tpu.memory_space<vmem>>, vector<1x128xf32>
    %c11 = arith.constant 11 : index
    %c0_11 = arith.constant 0 : index
    %11 = vector.load %arg7[%c11, %c0_11] : memref<13x256xf32, #tpu.memory_space<vmem>>, vector<1x128xf32>
    %c12 = arith.constant 12 : index
    %c0_12 = arith.constant 0 : index
    %12 = vector.load %arg7[%c12, %c0_12] : memref<13x256xf32, #tpu.memory_space<vmem>>, vector<1x128xf32>
    %c0_13 = arith.constant 0 : index
    %c0_14 = arith.constant 0 : index
    %13 = vector.load %arg1[%c0_13, %c0_14] : memref<8x16xf32, #tpu.memory_space<vmem>>, vector<8x16xf32>
    %14 = arith.truncf %13 : vector<8x16xf32> to vector<8x16xbf16>
    %c0_15 = arith.constant 0 : index
    %c0_16 = arith.constant 0 : index
    %15 = vector.load %arg2[%c0_15, %c0_16] : memref<16x128xbf16, #tpu.memory_space<vmem>>, vector<16x128xbf16>
    %cst = arith.constant dense<0.000000e+00> : vector<8x128xf32>
    %16 = tpu.matmul %14, %15, %cst {dimension_numbers = #tpu.dot_dimension_numbers<[1], [0], [0], [1], [0, 0, 1, 1], [], []>} : vector<8x16xbf16>, vector<16x128xbf16>, vector<8x128xf32> -> vector<8x128xf32>
    %17 = vector.broadcast %0 : vector<1x128xf32> to vector<8x128xf32>
    %18 = arith.addf %16, %17 : vector<8x128xf32>
    %cst_17 = arith.constant dense<0.000000e+00> : vector<8xf32>
    %19 = vector.multi_reduction <add>, %18, %cst_17 [1] : vector<8x128xf32> to vector<8xf32>
    %20 = vector.shape_cast %19 : vector<8xf32> to vector<8x1xf32>
    %cst_18 = arith.constant 1.280000e+02 : f32
    %21 = vector.broadcast %cst_18 : f32 to vector<8x1xf32>
    %22 = arith.divf %20, %21 : vector<8x1xf32>
    %23 = arith.mulf %18, %18 : vector<8x128xf32>
    %cst_19 = arith.constant dense<0.000000e+00> : vector<8xf32>
    %24 = vector.multi_reduction <add>, %23, %cst_19 [1] : vector<8x128xf32> to vector<8xf32>
    %25 = vector.shape_cast %24 : vector<8xf32> to vector<8x1xf32>
    %cst_20 = arith.constant 1.280000e+02 : f32
    %26 = vector.broadcast %cst_20 : f32 to vector<8x1xf32>
    %27 = arith.divf %25, %26 : vector<8x1xf32>
    %28 = arith.mulf %22, %22 : vector<8x1xf32>
    %29 = arith.subf %27, %28 : vector<8x1xf32>
    %cst_21 = arith.constant 9.99999974E-6 : f32
    %30 = vector.broadcast %cst_21 : f32 to vector<8x1xf32>
    %31 = arith.addf %29, %30 : vector<8x1xf32>
    %32 = math.rsqrt %31 : vector<8x1xf32>
    %33 = vector.broadcast %22 : vector<8x1xf32> to vector<8x128xf32>
    %34 = arith.subf %18, %33 : vector<8x128xf32>
    %35 = vector.broadcast %32 : vector<8x1xf32> to vector<8x128xf32>
    %36 = arith.mulf %34, %35 : vector<8x128xf32>
    %37 = vector.broadcast %1 : vector<1x128xf32> to vector<8x128xf32>
    %38 = arith.mulf %36, %37 : vector<8x128xf32>
    %39 = vector.broadcast %2 : vector<1x128xf32> to vector<8x128xf32>
    %40 = arith.addf %38, %39 : vector<8x128xf32>
    %cst_22 = arith.constant 0.000000e+00 : f32
    %41 = vector.broadcast %cst_22 : f32 to vector<8x128xf32>
    %42 = arith.cmpf ogt, %40, %41 : vector<8x128xf32>
    %cst_23 = arith.constant 2.000000e-01 : f32
    %43 = vector.broadcast %cst_23 : f32 to vector<8x128xf32>
    %44 = arith.mulf %43, %40 : vector<8x128xf32>
    %45 = arith.select %42, %40, %44 : vector<8x128xi1>, vector<8x128xf32>
    %46 = arith.truncf %45 : vector<8x128xf32> to vector<8x128xbf16>
    %c0_24 = arith.constant 0 : index
    %c0_25 = arith.constant 0 : index
    %47 = vector.load %arg3[%c0_24, %c0_25] : memref<128x256xbf16, #tpu.memory_space<vmem>>, vector<128x256xbf16>
    %cst_26 = arith.constant dense<0.000000e+00> : vector<8x256xf32>
    %48 = tpu.matmul %46, %47, %cst_26 {dimension_numbers = #tpu.dot_dimension_numbers<[1], [0], [0], [1], [0, 0, 1, 1], [], []>} : vector<8x128xbf16>, vector<128x256xbf16>, vector<8x256xf32> -> vector<8x256xf32>
    %49 = vector.broadcast %3 : vector<1x256xf32> to vector<8x256xf32>
    %50 = arith.addf %48, %49 : vector<8x256xf32>
    %cst_27 = arith.constant dense<0.000000e+00> : vector<8xf32>
    %51 = vector.multi_reduction <add>, %50, %cst_27 [1] : vector<8x256xf32> to vector<8xf32>
    %52 = vector.shape_cast %51 : vector<8xf32> to vector<8x1xf32>
    %cst_28 = arith.constant 2.560000e+02 : f32
    %53 = vector.broadcast %cst_28 : f32 to vector<8x1xf32>
    %54 = arith.divf %52, %53 : vector<8x1xf32>
    %55 = arith.mulf %50, %50 : vector<8x256xf32>
    %cst_29 = arith.constant dense<0.000000e+00> : vector<8xf32>
    %56 = vector.multi_reduction <add>, %55, %cst_29 [1] : vector<8x256xf32> to vector<8xf32>
    %57 = vector.shape_cast %56 : vector<8xf32> to vector<8x1xf32>
    %cst_30 = arith.constant 2.560000e+02 : f32
    %58 = vector.broadcast %cst_30 : f32 to vector<8x1xf32>
    %59 = arith.divf %57, %58 : vector<8x1xf32>
    %60 = arith.mulf %54, %54 : vector<8x1xf32>
    %61 = arith.subf %59, %60 : vector<8x1xf32>
    %cst_31 = arith.constant 9.99999974E-6 : f32
    %62 = vector.broadcast %cst_31 : f32 to vector<8x1xf32>
    %63 = arith.addf %61, %62 : vector<8x1xf32>
    %64 = math.rsqrt %63 : vector<8x1xf32>
    %65 = vector.broadcast %54 : vector<8x1xf32> to vector<8x256xf32>
    %66 = arith.subf %50, %65 : vector<8x256xf32>
    %67 = vector.broadcast %64 : vector<8x1xf32> to vector<8x256xf32>
    %68 = arith.mulf %66, %67 : vector<8x256xf32>
    %69 = vector.broadcast %4 : vector<1x256xf32> to vector<8x256xf32>
    %70 = arith.mulf %68, %69 : vector<8x256xf32>
    %71 = vector.broadcast %5 : vector<1x256xf32> to vector<8x256xf32>
    %72 = arith.addf %70, %71 : vector<8x256xf32>
    %cst_32 = arith.constant 0.000000e+00 : f32
    %73 = vector.broadcast %cst_32 : f32 to vector<8x256xf32>
    %74 = arith.cmpf ogt, %72, %73 : vector<8x256xf32>
    %cst_33 = arith.constant 2.000000e-01 : f32
    %75 = vector.broadcast %cst_33 : f32 to vector<8x256xf32>
    %76 = arith.mulf %75, %72 : vector<8x256xf32>
    %77 = arith.select %74, %72, %76 : vector<8x256xi1>, vector<8x256xf32>
    %78 = arith.truncf %77 : vector<8x256xf32> to vector<8x256xbf16>
    %c0_34 = arith.constant 0 : index
    %c0_35 = arith.constant 0 : index
    %79 = vector.load %arg4[%c0_34, %c0_35] : memref<256x256xbf16, #tpu.memory_space<vmem>>, vector<256x256xbf16>
    %cst_36 = arith.constant dense<0.000000e+00> : vector<8x256xf32>
    %80 = tpu.matmul %78, %79, %cst_36 {dimension_numbers = #tpu.dot_dimension_numbers<[1], [0], [0], [1], [0, 0, 1, 1], [], []>} : vector<8x256xbf16>, vector<256x256xbf16>, vector<8x256xf32> -> vector<8x256xf32>
    %81 = vector.broadcast %6 : vector<1x256xf32> to vector<8x256xf32>
    %82 = arith.addf %80, %81 : vector<8x256xf32>
    %cst_37 = arith.constant dense<0.000000e+00> : vector<8xf32>
    %83 = vector.multi_reduction <add>, %82, %cst_37 [1] : vector<8x256xf32> to vector<8xf32>
    %84 = vector.shape_cast %83 : vector<8xf32> to vector<8x1xf32>
    %cst_38 = arith.constant 2.560000e+02 : f32
    %85 = vector.broadcast %cst_38 : f32 to vector<8x1xf32>
    %86 = arith.divf %84, %85 : vector<8x1xf32>
    %87 = arith.mulf %82, %82 : vector<8x256xf32>
    %cst_39 = arith.constant dense<0.000000e+00> : vector<8xf32>
    %88 = vector.multi_reduction <add>, %87, %cst_39 [1] : vector<8x256xf32> to vector<8xf32>
    %89 = vector.shape_cast %88 : vector<8xf32> to vector<8x1xf32>
    %cst_40 = arith.constant 2.560000e+02 : f32
    %90 = vector.broadcast %cst_40 : f32 to vector<8x1xf32>
    %91 = arith.divf %89, %90 : vector<8x1xf32>
    %92 = arith.mulf %86, %86 : vector<8x1xf32>
    %93 = arith.subf %91, %92 : vector<8x1xf32>
    %cst_41 = arith.constant 9.99999974E-6 : f32
    %94 = vector.broadcast %cst_41 : f32 to vector<8x1xf32>
    %95 = arith.addf %93, %94 : vector<8x1xf32>
    %96 = math.rsqrt %95 : vector<8x1xf32>
    %97 = vector.broadcast %86 : vector<8x1xf32> to vector<8x256xf32>
    %98 = arith.subf %82, %97 : vector<8x256xf32>
    %99 = vector.broadcast %96 : vector<8x1xf32> to vector<8x256xf32>
    %100 = arith.mulf %98, %99 : vector<8x256xf32>
    %101 = vector.broadcast %7 : vector<1x256xf32> to vector<8x256xf32>
    %102 = arith.mulf %100, %101 : vector<8x256xf32>
    %103 = vector.broadcast %8 : vector<1x256xf32> to vector<8x256xf32>
    %104 = arith.addf %102, %103 : vector<8x256xf32>
    %cst_42 = arith.constant 0.000000e+00 : f32
    %105 = vector.broadcast %cst_42 : f32 to vector<8x256xf32>
    %106 = arith.cmpf ogt, %104, %105 : vector<8x256xf32>
    %cst_43 = arith.constant 2.000000e-01 : f32
    %107 = vector.broadcast %cst_43 : f32 to vector<8x256xf32>
    %108 = arith.mulf %107, %104 : vector<8x256xf32>
    %109 = arith.select %106, %104, %108 : vector<8x256xi1>, vector<8x256xf32>
    %110 = arith.truncf %109 : vector<8x256xf32> to vector<8x256xbf16>
    %c0_44 = arith.constant 0 : index
    %c0_45 = arith.constant 0 : index
    %111 = vector.load %arg5[%c0_44, %c0_45] : memref<256x128xbf16, #tpu.memory_space<vmem>>, vector<256x128xbf16>
    %cst_46 = arith.constant dense<0.000000e+00> : vector<8x128xf32>
    %112 = tpu.matmul %110, %111, %cst_46 {dimension_numbers = #tpu.dot_dimension_numbers<[1], [0], [0], [1], [0, 0, 1, 1], [], []>} : vector<8x256xbf16>, vector<256x128xbf16>, vector<8x128xf32> -> vector<8x128xf32>
    %113 = vector.broadcast %9 : vector<1x128xf32> to vector<8x128xf32>
    %114 = arith.addf %112, %113 : vector<8x128xf32>
    %cst_47 = arith.constant dense<0.000000e+00> : vector<8xf32>
    %115 = vector.multi_reduction <add>, %114, %cst_47 [1] : vector<8x128xf32> to vector<8xf32>
    %116 = vector.shape_cast %115 : vector<8xf32> to vector<8x1xf32>
    %cst_48 = arith.constant 1.280000e+02 : f32
    %117 = vector.broadcast %cst_48 : f32 to vector<8x1xf32>
    %118 = arith.divf %116, %117 : vector<8x1xf32>
    %119 = arith.mulf %114, %114 : vector<8x128xf32>
    %cst_49 = arith.constant dense<0.000000e+00> : vector<8xf32>
    %120 = vector.multi_reduction <add>, %119, %cst_49 [1] : vector<8x128xf32> to vector<8xf32>
    %121 = vector.shape_cast %120 : vector<8xf32> to vector<8x1xf32>
    %cst_50 = arith.constant 1.280000e+02 : f32
    %122 = vector.broadcast %cst_50 : f32 to vector<8x1xf32>
    %123 = arith.divf %121, %122 : vector<8x1xf32>
    %124 = arith.mulf %118, %118 : vector<8x1xf32>
    %125 = arith.subf %123, %124 : vector<8x1xf32>
    %cst_51 = arith.constant 9.99999974E-6 : f32
    %126 = vector.broadcast %cst_51 : f32 to vector<8x1xf32>
    %127 = arith.addf %125, %126 : vector<8x1xf32>
    %128 = math.rsqrt %127 : vector<8x1xf32>
    %129 = vector.broadcast %118 : vector<8x1xf32> to vector<8x128xf32>
    %130 = arith.subf %114, %129 : vector<8x128xf32>
    %131 = vector.broadcast %128 : vector<8x1xf32> to vector<8x128xf32>
    %132 = arith.mulf %130, %131 : vector<8x128xf32>
    %133 = vector.broadcast %10 : vector<1x128xf32> to vector<8x128xf32>
    %134 = arith.mulf %132, %133 : vector<8x128xf32>
    %135 = vector.broadcast %11 : vector<1x128xf32> to vector<8x128xf32>
    %136 = arith.addf %134, %135 : vector<8x128xf32>
    %cst_52 = arith.constant 0.000000e+00 : f32
    %137 = vector.broadcast %cst_52 : f32 to vector<8x128xf32>
    %138 = arith.cmpf ogt, %136, %137 : vector<8x128xf32>
    %cst_53 = arith.constant 2.000000e-01 : f32
    %139 = vector.broadcast %cst_53 : f32 to vector<8x128xf32>
    %140 = arith.mulf %139, %136 : vector<8x128xf32>
    %141 = arith.select %138, %136, %140 : vector<8x128xi1>, vector<8x128xf32>
    %142 = arith.truncf %141 : vector<8x128xf32> to vector<8x128xbf16>
    %c0_54 = arith.constant 0 : index
    %c0_55 = arith.constant 0 : index
    %143 = vector.load %arg6[%c0_54, %c0_55] : memref<128x128xbf16, #tpu.memory_space<vmem>>, vector<128x128xbf16>
    %cst_56 = arith.constant dense<0.000000e+00> : vector<8x128xf32>
    %144 = tpu.matmul %142, %143, %cst_56 {dimension_numbers = #tpu.dot_dimension_numbers<[1], [0], [0], [1], [0, 0, 1, 1], [], []>} : vector<8x128xbf16>, vector<128x128xbf16>, vector<8x128xf32> -> vector<8x128xf32>
    %145 = vector.broadcast %12 : vector<1x128xf32> to vector<8x128xf32>
    %146 = arith.addf %144, %145 : vector<8x128xf32>
    %c0_57 = arith.constant 0 : index
    %c0_58 = arith.constant 0 : index
    %147 = vector.load %arg8[%c0_57, %c0_58] : memref<8x128xf32, #tpu.memory_space<vmem>>, vector<8x128xf32>
    tpu.vector_store %arg8[%c0_57, %c0_58], %146 {strides = array<i32>} : memref<8x128xf32, #tpu.memory_space<vmem>>, vector<8x128xf32>,
    return
  }
  func.func @transform_0(%arg0: i32) -> (i32, i32) {
    %c0_i32 = arith.constant 0 : i32
    %c0_i32_0 = arith.constant 0 : i32
    return %arg0, %c0_i32 : i32, i32
  }
  func.func @transform_1(%arg0: i32) -> (i32, i32) {
    %c0_i32 = arith.constant 0 : i32
    %c0_i32_0 = arith.constant 0 : i32
    %c0_i32_1 = arith.constant 0 : i32
    return %c0_i32, %c0_i32_0 : i32, i32
  }
  func.func @transform_2(%arg0: i32) -> (i32, i32) {
    %c0_i32 = arith.constant 0 : i32
    %c0_i32_0 = arith.constant 0 : i32
    %c0_i32_1 = arith.constant 0 : i32
    return %c0_i32, %c0_i32_0 : i32, i32
  }
  func.func @transform_3(%arg0: i32) -> (i32, i32) {
    %c0_i32 = arith.constant 0 : i32
    %c0_i32_0 = arith.constant 0 : i32
    %c0_i32_1 = arith.constant 0 : i32
    return %c0_i32, %c0_i32_0 : i32, i32
  }
  func.func @transform_4(%arg0: i32) -> (i32, i32) {
    %c0_i32 = arith.constant 0 : i32
    %c0_i32_0 = arith.constant 0 : i32
    %c0_i32_1 = arith.constant 0 : i32
    return %c0_i32, %c0_i32_0 : i32, i32
  }
  func.func @transform_5(%arg0: i32) -> (i32, i32) {
    %c0_i32 = arith.constant 0 : i32
    %c0_i32_0 = arith.constant 0 : i32
    %c0_i32_1 = arith.constant 0 : i32
    return %c0_i32, %c0_i32_0 : i32, i32
  }
  func.func @transform_6(%arg0: i32) -> (i32, i32) {
    %c0_i32 = arith.constant 0 : i32
    %c0_i32_0 = arith.constant 0 : i32
    %c0_i32_1 = arith.constant 0 : i32
    return %c0_i32, %c0_i32_0 : i32, i32
  }
  func.func @transform_7(%arg0: i32) -> (i32, i32) {
    %c0_i32 = arith.constant 0 : i32
    %c0_i32_0 = arith.constant 0 : i32
    return %arg0, %c0_i32 : i32, i32
  }
}

</mosaic_0001>

<llo_original>
// kernel: generator_forward.1
$region0: #{generator_forward.1}
  #allocation0 [shape = 'u32[]', space=smem, size = 0x4, offset = 0x4, fixed_abs, tag = 'smem constant byte address 0x4 - core index']
  #allocation1 [shape = 'u32[144,128]{1,0:T(1,128)}', space=vmem, size = 0x12000, scoped, tag = 'internal scratch']
  %s0 = inlined_call_operand.vmem [shape: f32[16,16], index: 0, kind: input, shape index: {}]
  %s1 = inlined_call_operand.vmem [shape: bf16[16,128], index: 1, kind: input, shape index: {}]
  %s2 = inlined_call_operand.hbm [shape: bf16[128,256], index: 2, kind: input, shape index: {}]
  %s3 = inlined_call_operand.hbm [shape: bf16[256,256], index: 3, kind: input, shape index: {}]
  %s4 = inlined_call_operand.hbm [shape: bf16[256,128], index: 4, kind: input, shape index: {}]
  %s5 = inlined_call_operand.vmem [shape: bf16[128,128], index: 5, kind: input, shape index: {}]
  %s6 = inlined_call_operand.hbm [shape: f32[13,256], index: 6, kind: input, shape index: {}]
  %s7 = inlined_call_operand.vmem [shape: f32[16,128], index: 7, kind: output, shape index: {}]
  %s8 = sld [smem:[#allocation0]]
  $region77: #{generator_forward.1} parent=0
    _
  %s10 = ssub.s32 1, %s8
  %s11 = scalar_select 0, %s10, %s8
  $region1: #{generator_forward.1} parent=0
    #allocation2 [shape = 'u8[65536]{0}', space=vmem, size = 0x10000, scoped, tag = 'input window, operand 2, single buffered']
    #allocation3 [shape = 's32[2]{0}', space=sflag, size = 0x8, scoped, tag = 'scoped memory for generator_forward.1']
    #allocation4 [shape = 'u8[131072]{0}', space=vmem, size = 0x20000, scoped, tag = 'input window, operand 3, single buffered']
    #allocation5 [shape = 's32[1]{0}', space=sflag, size = 0x4, scoped, tag = 'scoped memory for generator_forward.1']
    #allocation6 [shape = 'u8[65536]{0}', space=vmem, size = 0x10000, scoped, tag = 'input window, operand 4, single buffered']
    #allocation7 [shape = 'u8[16384]{0}', space=vmem, size = 0x4000, scoped, tag = 'input window, operand 6, single buffered']
    #allocation8 [shape = 's32[1]{0}', space=sflag, size = 0x4, scoped, tag = 'scoped memory for generator_forward.1']
    %12 = vsyncpa [#allocation3], 0
    %13 = vsyncpa [#allocation5], 0
    %14 = vsyncpa [#allocation8], 0
    loop: start=0, step=1, limit=4
    $region2: #{generator_forward.1} parent=1 // loop_pre_header
      _
    $region3: #{generator_forward.1} parent=1 // loop_header
      %s16 = sphi 0, %s20
      %p17 = scmp.ge.s32.totalorder %s16, 4
      %s26 = sphi 0, %s28
      %s29 = sphi 0, %s26
      %s30 = sphi 0, %s29
      %s46 = sphi 0, %s30
      %s50 = sphi 0, %s50
      %s52 = sphi 0, %s50
      %s53 = sphi 0, %s52
      %s67 = sphi 0, %s53
      %s71 = sphi 0, %s71
      %s73 = sphi 0, %s71
      %s74 = sphi 0, %s73
      %s88 = sphi 0, %s74
      %s92 = sphi 0, %s92
      %s94 = sphi 0, %s92
      %s95 = sphi 0, %s94
      %s109 = sphi 0, %s95
      %s113 = sphi 0, %s113
      %s115 = sphi 0, %s113
      %s116 = sphi 0, %s115
      %s130 = sphi 0, %s116
      %s134 = sphi 0, %s134
      %s136 = sphi 0, %s134
      %s137 = sphi 0, %s136
      %s151 = sphi 0, %s137
      %s155 = sphi 0, %s155
      %s157 = sphi 0, %s155
      %s158 = sphi 0, %s157
      %s172 = sphi 0, %s158
      %s178 = sphi 0, %s180
      %s181 = sphi 0, %s178
      %s182 = sphi 0, %s181
      %s198 = sphi 0, %s182
    $region4: #{generator_forward.1} parent=1 // loop_header_branch
      %19 = sbr.rel (%p17) target = $region8
    $region5: #{generator_forward.1} parent=1 // loop_body
      %s21 = ssub.s32 %s16, 1
      %s22 = ssub.s32 %s16, 2
      %s23 = sadd.s32 %s16, 1
      %s24 = ssub.s32 %s16, %s23
      %p25 = scmp.eq.s32.totalorder %s24, 0
      %s27 = sadd.s32 %s26, 1
      %s28 = scalar_select %p25, %s26, %s27
      %p31 = pneg %p25
      %p32 = scmp.eq.s32.totalorder %s16, 1
      %p33 = por %p31, %p32
      %p34 = scmp.ne.s32.totalorder %s26, %s29
      %p35 = scmp.eq.s32.totalorder %s16, 0
      %p36 = por %p34, %p35
      %p37 = scmp.ne.s32.totalorder %s26, %s29
      %p38 = scmp.eq.s32.totalorder %s21, 1
      %p39 = por %p37, %p38
      %p40 = scmp.ne.s32.totalorder %s29, %s30
      %p41 = scmp.eq.s32.totalorder %s21, 0
      %p42 = por %p40, %p41
      %p43 = scmp.ne.s32.totalorder %s29, %s30
      %p44 = scmp.eq.s32.totalorder %s22, 1
      %p45 = por %p43, %p44
      %p47 = scmp.ne.s32.totalorder %s30, %s46
      %p48 = scmp.eq.s32.totalorder %s22, 0
      %p49 = por %p47, %p48
      %s51 = sadd.s32 %s50, 1
      %p54 = scmp.eq.s32.totalorder %s16, 1
      %p55 = scmp.ne.s32.totalorder %s50, %s52
      %p56 = scmp.eq.s32.totalorder %s16, 0
      %p57 = por %p55, %p56
      %p58 = scmp.ne.s32.totalorder %s50, %s52
      %p59 = scmp.eq.s32.totalorder %s21, 1
      %p60 = por %p58, %p59
      %p61 = scmp.ne.s32.totalorder %s52, %s53
      %p62 = scmp.eq.s32.totalorder %s21, 0
      %p63 = por %p61, %p62
      %p64 = scmp.ne.s32.totalorder %s52, %s53
      %p65 = scmp.eq.s32.totalorder %s22, 1
      %p66 = por %p64, %p65
      %p68 = scmp.ne.s32.totalorder %s53, %s67
      %p69 = scmp.eq.s32.totalorder %s22, 0
      %p70 = por %p68, %p69
      %s72 = sadd.s32 %s71, 1
      %p75 = scmp.eq.s32.totalorder %s16, 1
      %p76 = scmp.ne.s32.totalorder %s71, %s73
      %p77 = scmp.eq.s32.totalorder %s16, 0
      %p78 = por %p76, %p77
      %p79 = scmp.ne.s32.totalorder %s71, %s73
      %p80 = scmp.eq.s32.totalorder %s21, 1
      %p81 = por %p79, %p80
      %p82 = scmp.ne.s32.totalorder %s73, %s74
      %p83 = scmp.eq.s32.totalorder %s21, 0
      %p84 = por %p82, %p83
      %p85 = scmp.ne.s32.totalorder %s73, %s74
      %p86 = scmp.eq.s32.totalorder %s22, 1
      %p87 = por %p85, %p86
      %p89 = scmp.ne.s32.totalorder %s74, %s88
      %p90 = scmp.eq.s32.totalorder %s22, 0
      %p91 = por %p89, %p90
      %s93 = sadd.s32 %s92, 1
      %p96 = scmp.eq.s32.totalorder %s16, 1
      %p97 = scmp.ne.s32.totalorder %s92, %s94
      %p98 = scmp.eq.s32.totalorder %s16, 0
      %p99 = por %p97, %p98
      %p100 = scmp.ne.s32.totalorder %s92, %s94
      %p101 = scmp.eq.s32.totalorder %s21, 1
      %p102 = por %p100, %p101
      %p103 = scmp.ne.s32.totalorder %s94, %s95
      %p104 = scmp.eq.s32.totalorder %s21, 0
      %p105 = por %p103, %p104
      %p106 = scmp.ne.s32.totalorder %s94, %s95
      %p107 = scmp.eq.s32.totalorder %s22, 1
      %p108 = por %p106, %p107
      %p110 = scmp.ne.s32.totalorder %s95, %s109
      %p111 = scmp.eq.s32.totalorder %s22, 0
      %p112 = por %p110, %p111
      %s114 = sadd.s32 %s113, 1
      %p117 = scmp.eq.s32.totalorder %s16, 1
      %p118 = scmp.ne.s32.totalorder %s113, %s115
      %p119 = scmp.eq.s32.totalorder %s16, 0
      %p120 = por %p118, %p119
      %p121 = scmp.ne.s32.totalorder %s113, %s115
      %p122 = scmp.eq.s32.totalorder %s21, 1
      %p123 = por %p121, %p122
      %p124 = scmp.ne.s32.totalorder %s115, %s116
      %p125 = scmp.eq.s32.totalorder %s21, 0
      %p126 = por %p124, %p125
      %p127 = scmp.ne.s32.totalorder %s115, %s116
      %p128 = scmp.eq.s32.totalorder %s22, 1
      %p129 = por %p127, %p128
      %p131 = scmp.ne.s32.totalorder %s116, %s130
      %p132 = scmp.eq.s32.totalorder %s22, 0
      %p133 = por %p131, %p132
      %s135 = sadd.s32 %s134, 1
      %p138 = scmp.eq.s32.totalorder %s16, 1
      %p139 = scmp.ne.s32.totalorder %s134, %s136
      %p140 = scmp.eq.s32.totalorder %s16, 0
      %p141 = por %p139, %p140
      %p142 = scmp.ne.s32.totalorder %s134, %s136
      %p143 = scmp.eq.s32.totalorder %s21, 1
      %p144 = por %p142, %p143
      %p145 = scmp.ne.s32.totalorder %s136, %s137
      %p146 = scmp.eq.s32.totalorder %s21, 0
      %p147 = por %p145, %p146
      %p148 = scmp.ne.s32.totalorder %s136, %s137
      %p149 = scmp.eq.s32.totalorder %s22, 1
      %p150 = por %p148, %p149
      %p152 = scmp.ne.s32.totalorder %s137, %s151
      %p153 = scmp.eq.s32.totalorder %s22, 0
      %p154 = por %p152, %p153
      %s156 = sadd.s32 %s155, 1
      %p159 = scmp.eq.s32.totalorder %s16, 1
      %p160 = scmp.ne.s32.totalorder %s155, %s157
      %p161 = scmp.eq.s32.totalorder %s16, 0
      %p162 = por %p160, %p161
      %p163 = scmp.ne.s32.totalorder %s155, %s157
      %p164 = scmp.eq.s32.totalorder %s21, 1
      %p165 = por %p163, %p164
      %p166 = scmp.ne.s32.totalorder %s157, %s158
      %p167 = scmp.eq.s32.totalorder %s21, 0
      %p168 = por %p166, %p167
      %p169 = scmp.ne.s32.totalorder %s157, %s158
      %p170 = scmp.eq.s32.totalorder %s22, 1
      %p171 = por %p169, %p170
      %p173 = scmp.ne.s32.totalorder %s158, %s172
      %p174 = scmp.eq.s32.totalorder %s22, 0
      %p175 = por %p173, %p174
      %s176 = ssub.s32 %s16, %s23
      %p177 = scmp.eq.s32.totalorder %s176, 0
      %s179 = sadd.s32 %s178, 1
      %s180 = scalar_select %p177, %s178, %s179
      %p183 = pneg %p177
      %p184 = scmp.eq.s32.totalorder %s16, 1
      %p185 = por %p183, %p184
      %p186 = scmp.ne.s32.totalorder %s178, %s181
      %p187 = scmp.eq.s32.totalorder %s16, 0
      %p188 = por %p186, %p187
      %p189 = scmp.ne.s32.totalorder %s178, %s181
      %p190 = scmp.eq.s32.totalorder %s21, 1
      %p191 = por %p189, %p190
      %p192 = scmp.ne.s32.totalorder %s181, %s182
      %p193 = scmp.eq.s32.totalorder %s21, 0
      %p194 = por %p192, %p193
      %p195 = scmp.ne.s32.totalorder %s181, %s182
      %p196 = scmp.eq.s32.totalorder %s22, 1
      %p197 = por %p195, %p196
      %p199 = scmp.ne.s32.totalorder %s182, %s198
      %p200 = scmp.eq.s32.totalorder %s22, 0
      %p201 = por %p199, %p200
      %p202 = scmp.le.s32.totalorder 1, %s16
      %p203 = scmp.lt.s32.totalorder %s16, 3
      %p204 = pnand %p202, %p203
      %p205 = pneg %p204
      // Predicated region
      $region9: #{generator_forward.1} parent=5 // pred_check
        _
      $region10: #{generator_forward.1} parent=5 // pred_check_branch
        %207 = sbr.rel (%p204) target = $region12
      $region11: #{generator_forward.1} parent=5 // pred_region
        %s208 = ssub.s32 %s16, 1
        // Predicated region
        $region13: #{generator_forward.1} parent=11 // pred_check
          %p209 = pneg %p63
        $region14: #{generator_forward.1} parent=11 // pred_check_branch
          %211 = sbr.rel (%p209) target = $region16
        $region15: #{generator_forward.1} parent=11 // pred_region
          _
        $region16: #{generator_forward.1} parent=11 // pred_fallthru
          _
        // Predicated region
        $region17: #{generator_forward.1} parent=11 // pred_check
          %p212 = pneg %p84
        $region18: #{generator_forward.1} parent=11 // pred_check_branch
          %214 = sbr.rel (%p212) target = $region20
        $region19: #{generator_forward.1} parent=11 // pred_region
          %s216 = ssub.s32 2048, 2048
          %217 = vsyncadd [#allocation3], %s216
          %s218 = sshll.u32 [#allocation2], 4
          %s219 = int_to_ptr.vmem [resolvable:$true] %s218
          %224 = dma.hbm_to_vmem [thread:$0]  %s2, 2048, %s219, [#allocation3], 128, 128, 8
        $region20: #{generator_forward.1} parent=11 // pred_fallthru
          _
        // Predicated region
        $region21: #{generator_forward.1} parent=11 // pred_check
          %p225 = pneg %p105
        $region22: #{generator_forward.1} parent=11 // pred_check_branch
          %227 = sbr.rel (%p225) target = $region24
        $region23: #{generator_forward.1} parent=11 // pred_region
          %s229 = ssub.s32 4096, 4096
          %230 = vsyncadd [#allocation5], %s229
          %s231 = sshll.u32 [#allocation4], 4
          %s232 = int_to_ptr.vmem [resolvable:$true] %s231
          %237 = dma.hbm_to_vmem [thread:$0]  %s3, 4096, %s232, [#allocation5], 128, 128, 8
        $region24: #{generator_forward.1} parent=11 // pred_fallthru
          _
        // Predicated region
        $region25: #{generator_forward.1} parent=11 // pred_check
          %p238 = pneg %p126
        $region26: #{generator_forward.1} parent=11 // pred_check_branch
          %240 = sbr.rel (%p238) target = $region28
        $region27: #{generator_forward.1} parent=11 // pred_region
          %s242 = ssub.s32 2048, 2048
          %243 = vsyncadd [#allocation5], %s242
          %s244 = sshll.u32 [#allocation6], 4
          %s245 = int_to_ptr.vmem [resolvable:$true] %s244
          %250 = dma.hbm_to_vmem [thread:$0]  %s4, 2048, %s245, [#allocation5], 64, 64, 4
        $region28: #{generator_forward.1} parent=11 // pred_fallthru
          _
        // Predicated region
        $region29: #{generator_forward.1} parent=11 // pred_check
          %p251 = pneg %p147
        $region30: #{generator_forward.1} parent=11 // pred_check_branch
          %253 = sbr.rel (%p251) target = $region32
        $region31: #{generator_forward.1} parent=11 // pred_region
          _
        $region32: #{generator_forward.1} parent=11 // pred_fallthru
          _
        // Predicated region
        $region33: #{generator_forward.1} parent=11 // pred_check
          %p254 = pneg %p168
        $region34: #{generator_forward.1} parent=11 // pred_check_branch
          %256 = sbr.rel (%p254) target = $region36
        $region35: #{generator_forward.1} parent=11 // pred_region
          %s258 = ssub.s32 512, 512
          %259 = vsyncadd [#allocation8], %s258
          %s260 = sshll.u32 [#allocation7], 4
          %s261 = int_to_ptr.vmem [resolvable:$true] %s260
          %266 = dma.hbm_to_vmem [thread:$0]  %s6, 512, %s261, [#allocation8], 256, 256, 16
        $region36: #{generator_forward.1} parent=11 // pred_fallthru
          _
      $region12: #{generator_forward.1} parent=5 // pred_fallthru
        _
      %p267 = scmp.lt.s32.totalorder %s16, 2
      // Predicated region
      $region37: #{generator_forward.1} parent=5 // pred_check
        %p268 = pneg %p267
      $region38: #{generator_forward.1} parent=5 // pred_check_branch
        %270 = sbr.rel (%p268) target = $region40
      $region39: #{generator_forward.1} parent=5 // pred_region
        // Predicated region
        $region41: #{generator_forward.1} parent=39 // pred_check
          %p271 = pneg %p36
        $region42: #{generator_forward.1} parent=39 // pred_check_branch
          %273 = sbr.rel (%p271) target = $region44
        $region43: #{generator_forward.1} parent=39 // pred_region
          %p274 = scmp.lt.s32.totalorder %s16, 1
          %s275 = scalar_select %p274, %s16, 1
          %s276 = smul.addr %s275, 8
          %s277 = scalar_lea.vmem %s0, %s276
        $region44: #{generator_forward.1} parent=39 // pred_fallthru
          _
      $region40: #{generator_forward.1} parent=5 // pred_fallthru
        _
      %p278 = scmp.le.s32.totalorder 1, %s16
      %p279 = scmp.lt.s32.totalorder %s16, 3
      %p280 = pnand %p278, %p279
      %p281 = pneg %p280
      // Predicated region
      $region45: #{generator_forward.1} parent=5 // pred_check
        _
      $region46: #{generator_forward.1} parent=5 // pred_check_branch
        %283 = sbr.rel (%p280) target = $region48
      $region47: #{generator_forward.1} parent=5 // pred_region
        %s284 = ssub.s32 %s16, 1
        // Predicated region
        $region49: #{generator_forward.1} parent=47 // pred_check
          %p285 = pneg %p84
        $region50: #{generator_forward.1} parent=47 // pred_check_branch
          %287 = sbr.rel (%p285) target = $region52
        $region51: #{generator_forward.1} parent=47 // pred_region
          %288 = dma.done [#allocation3], 2048
        $region52: #{generator_forward.1} parent=47 // pred_fallthru
          _
        // Predicated region
        $region53: #{generator_forward.1} parent=47 // pred_check
          %p289 = pneg %p105
        $region54: #{generator_forward.1} parent=47 // pred_check_branch
          %291 = sbr.rel (%p289) target = $region56
        $region55: #{generator_forward.1} parent=47 // pred_region
          %292 = dma.done [#allocation5], 4096
        $region56: #{generator_forward.1} parent=47 // pred_fallthru
          _
        // Predicated region
        $region57: #{generator_forward.1} parent=47 // pred_check
          %p293 = pneg %p126
        $region58: #{generator_forward.1} parent=47 // pred_check_branch
          %295 = sbr.rel (%p293) target = $region60
        $region59: #{generator_forward.1} parent=47 // pred_region
          %296 = dma.done [#allocation5], 2048
        $region60: #{generator_forward.1} parent=47 // pred_fallthru
          _
        // Predicated region
        $region61: #{generator_forward.1} parent=47 // pred_check
          %p297 = pneg %p168
        $region62: #{generator_forward.1} parent=47 // pred_check_branch
          %299 = sbr.rel (%p297) target = $region64
        $region63: #{generator_forward.1} parent=47 // pred_region
          %300 = dma.done [#allocation8], 512
        $region64: #{generator_forward.1} parent=47 // pred_fallthru
          _
        %p301 = scmp.lt.s32.totalorder %s21, 1
        %s302 = scalar_select %p301, %s21, 1
        %s303 = smul.addr %s302, 8
        %s304 = scalar_lea.vmem %s0, %s303
        %p305 = pneg %p42
        %p306 = pneg %p39
        %p307 = pneg %p63
        %p308 = pneg %p60
        %p309 = pneg %p84
        %p310 = pneg %p81
        %p311 = pneg %p105
        %p312 = pneg %p102
        %p313 = pneg %p126
        %p314 = pneg %p123
        %p315 = pneg %p147
        %p316 = pneg %p144
        %p317 = pneg %p168
        %p318 = pneg %p165
        %p319 = pneg %p194
        %p320 = pneg %p191
        %p321 = scmp.lt.s32.totalorder %s21, 1
        %s322 = scalar_select %p321, %s21, 1
        %s323 = smul.addr %s322, 8
        %s324 = scalar_lea.vmem %s7, %s323
        %p325 = scmp.lt.s32.totalorder %s21, 1
        %s326 = scalar_select %p325, %s21, 1
        %s327 = smul.addr %s326, 8
        %s328 = scalar_lea.vmem %s0, %s327
        %p329 = scmp.lt.s32.totalorder %s21, 1
        %s330 = scalar_select %p329, %s21, 1
        %s331 = smul.addr %s330, 8
        %s332 = scalar_lea.vmem %s7, %s331
        %v334 = vld [vmem:[#allocation7] ss:$0 sm:$0xff]
        %v335 = vld [vmem:[#allocation7 + $0x1] ss:$0 sm:$0xff]
        %v336 = vld [vmem:[#allocation7 + $0x2] ss:$0 sm:$0xff]
        %s337 = scalar_lea.vmem [#allocation7], 3
        %v338 = vld [vmem:[%s337] ss:$8 sm:$0x3]
        %s339 = scalar_lea.vmem [#allocation7], 4
        %v340 = vld [vmem:[%s339] ss:$8 sm:$0x3]
        %s341 = scalar_lea.vmem [#allocation7], 5
        %v342 = vld [vmem:[%s341] ss:$8 sm:$0x3]
        %s343 = scalar_lea.vmem [#allocation7], 6
        %v344 = vld [vmem:[%s343] ss:$8 sm:$0x3]
        %s345 = scalar_lea.vmem [#allocation7], 7
        %v346 = vld [vmem:[%s345] ss:$8 sm:$0x3]
        %s347 = scalar_lea.vmem [#allocation7], 16
        %v348 = vld [vmem:[%s347] ss:$8 sm:$0x3]
        %v349 = vld [vmem:[#allocation7 + $0x11] ss:$0 sm:$0xff]
        %v350 = vld [vmem:[#allocation7 + $0x12] ss:$0 sm:$0xff]
        %v351 = vld [vmem:[#allocation7 + $0x13] ss:$0 sm:$0xff]
        %v352 = vld [vmem:[#allocation7 + $0x14] ss:$0 sm:$0xff]
        %v353 = vld [vmem:[%s328] sm:$0xff]
        %v354 = vpack.c.bf16 %v353, %v353
        %v355 = vld [vmem:[%s1] sm:$0xf]
        %v356 = vld [vmem:[%s1 + $0x4] sm:$0xf]
        %v359 = vunpack.c.l.b16 %v355
        %v360 = vunpack.c.l.b16 %v356
        %v361 = vpack.c.b16 %v360, %v359
        %vm363 = vcmask 130048
        %v365 = vsel %vm363, %v354, 0
        %367 = vmatprep.subr.bf16.mxu0 0
        %368 = vmatpush1.bf16.msra.mxu0 0
        %369 = vmatprep.subr.bf16.mxu0 0
        %370 = vmatpush1.bf16.msra.mxu0 0
        %371 = vmatprep.subr.bf16.mxu0 0
        %372 = vmatpush1.bf16.msra.mxu0 0
        %373 = vmatprep.subr.bf16.mxu0 0
        %374 = vmatpush1.bf16.msra.mxu0 0
        %375 = vmatprep.subr.bf16.mxu0 0
        %376 = vmatpush1.bf16.msra.mxu0 0
        %377 = vmatprep.subr.bf16.mxu0 0
        %378 = vmatpush1.bf16.msra.mxu0 0
        %379 = vmatprep.subr.bf16.mxu0 0
        %380 = vmatpush1.bf16.msra.mxu0 0
        %381 = vmatprep.subr.bf16.mxu0 0
        %382 = vmatpush1.bf16.msra.mxu0 %v361
        %383 = vmatprep.subr.bf16.mxu0 0
        %384 = vmatpush2.bf16.msra.mxu0 0
        %385 = vmatprep.subr.bf16.mxu0 0
        %386 = vmatpush2.bf16.msra.mxu0 0
        %387 = vmatprep.subr.bf16.mxu0 0
        %388 = vmatpush2.bf16.msra.mxu0 0
        %389 = vmatprep.subr.bf16.mxu0 0
        %390 = vmatpush2.bf16.msra.mxu0 0
        %391 = vmatprep.subr.bf16.mxu0 0
        %392 = vmatpush2.bf16.msra.mxu0 0
        %393 = vmatprep.subr.bf16.mxu0 0
        %394 = vmatpush2.bf16.msra.mxu0 0
        %395 = vmatprep.subr.bf16.mxu0 0
        %396 = vmatpush2.bf16.msra.mxu0 0
        %397 = vmatprep.subr.bf16.mxu0 0
        %398 = vmatpush2.bf16.msra.mxu0 0
        %399 = vmatprep.mubr.bf16.mxu0 0
        %400 = vmatmul.mubr.bf16.gmra.mxu0 %v365
        %v401 = vpop.f32.mrf.mxu0
        %v402 = vadd.f32 %v334, %v401
        %v403 = vpop.f32.mrf.mxu0
        %v404 = vpop.f32.mrf.mxu0
        %v405 = vpop.f32.mrf.mxu0
        %406 = vdwg.mxu0
        %407 = vadd.xlane.f32.xlu0 %v402
        %v408 = vpop.xlane.xlu0 %407
        %v409 = vrcp.pop 128.0
        %v410 = vmul.f32 %v408, %v409
        %v411 = vmul.f32 %v402, %v402
        %412 = vadd.xlane.f32.xlu0 %v411
        %v413 = vpop.xlane.xlu0 %412
        %v414 = vmul.f32 %v413, %v409
        %v415 = vmul.f32 %v410, %v410
        %v416 = vsub.f32 %v414, %v415
        %v417 = vadd.f32 %v416, 1e-05
        %v418 = vrsqrt.pop %v417
        %v419 = vsub.f32 %v402, %v410
        %v420 = vmul.f32 %v419, %v418
        %v421 = vmul.f32 %v420, %v335
        %v422 = vadd.f32 %v421, %v336
        %vm423 = vcmp.gt.f32.partialorder %v422, 0.0
        %v424 = vmul.f32 %v422, 0.2
        %v425 = vsel %vm423, %v422, %v424
        %v426 = vpack.c.bf16 %v425, %v425
        %v427 = vld [vmem:[#allocation2] sm:$0xff]
        %v428 = vld [vmem:[#allocation2 + $0x8] sm:$0xff]
        %v429 = vld [vmem:[#allocation2 + $0x10] sm:$0xff]
        %v430 = vld [vmem:[#allocation2 + $0x18] sm:$0xff]
        %v431 = vld [vmem:[#allocation2 + $0x20] sm:$0xff]
        %v432 = vld [vmem:[#allocation2 + $0x28] sm:$0xff]
        %v433 = vld [vmem:[#allocation2 + $0x30] sm:$0xff]
        %v434 = vld [vmem:[#allocation2 + $0x38] sm:$0xff]
        %v435 = vld [vmem:[#allocation2 + $0x40] sm:$0xff]
        %v436 = vld [vmem:[#allocation2 + $0x48] sm:$0xff]
        %v437 = vld [vmem:[#allocation2 + $0x50] sm:$0xff]
        %v438 = vld [vmem:[#allocation2 + $0x58] sm:$0xff]
        %v439 = vld [vmem:[#allocation2 + $0x60] sm:$0xff]
        %v440 = vld [vmem:[#allocation2 + $0x68] sm:$0xff]
        %v441 = vld [vmem:[#allocation2 + $0x70] sm:$0xff]
        %v442 = vld [vmem:[#allocation2 + $0x78] sm:$0xff]
        %v444 = vlaneseq
        %v445 = vshrl.u32 %v444, 7
        %v446 = vsub.s32 0, %v445
        %v447 = vrot.slane %v338, %v446
        %v448 = vlaneseq
        %v449 = vshrl.u32 %v448, 7
        %v450 = vsub.s32 1, %v449
        %v451 = vrot.slane %v338, %v450
        %v470 = vunpack.c.l.b16 %v427
        %v471 = vunpack.c.h.b16 %v427
        %v472 = vunpack.c.l.b16 %v428
        %v473 = vunpack.c.h.b16 %v428
        %v474 = vunpack.c.l.b16 %v429
        %v475 = vunpack.c.h.b16 %v429
        %v476 = vunpack.c.l.b16 %v430
        %v477 = vunpack.c.h.b16 %v430
        %v478 = vunpack.c.l.b16 %v431
        %v479 = vunpack.c.h.b16 %v431
        %v480 = vunpack.c.l.b16 %v432
        %v481 = vunpack.c.h.b16 %v432
        %v482 = vunpack.c.l.b16 %v433
        %v483 = vunpack.c.h.b16 %v433
        %v484 = vunpack.c.l.b16 %v434
        %v485 = vunpack.c.h.b16 %v434
        %v486 = vunpack.c.l.b16 %v435
        %v487 = vunpack.c.h.b16 %v435
        %v488 = vunpack.c.l.b16 %v436
        %v489 = vunpack.c.h.b16 %v436
        %v490 = vunpack.c.l.b16 %v437
        %v491 = vunpack.c.h.b16 %v437
        %v492 = vunpack.c.l.b16 %v438
        %v493 = vunpack.c.h.b16 %v438
        %v494 = vunpack.c.l.b16 %v439
        %v495 = vunpack.c.h.b16 %v439
        %v496 = vunpack.c.l.b16 %v440
        %v497 = vunpack.c.h.b16 %v440
        %v498 = vunpack.c.l.b16 %v441
        %v499 = vunpack.c.h.b16 %v441
        %v500 = vunpack.c.l.b16 %v442
        %v501 = vunpack.c.h.b16 %v442
        %v502 = vpack.c.b16 %v472, %v470
        %v503 = vpack.c.b16 %v473, %v471
        %v504 = vpack.c.b16 %v476, %v474
        %v505 = vpack.c.b16 %v477, %v475
        %v506 = vpack.c.b16 %v480, %v478
        %v507 = vpack.c.b16 %v481, %v479
        %v508 = vpack.c.b16 %v484, %v482
        %v509 = vpack.c.b16 %v485, %v483
        %v510 = vpack.c.b16 %v488, %v486
        %v511 = vpack.c.b16 %v489, %v487
        %v512 = vpack.c.b16 %v492, %v490
        %v513 = vpack.c.b16 %v493, %v491
        %v514 = vpack.c.b16 %v496, %v494
        %v515 = vpack.c.b16 %v497, %v495
        %v516 = vpack.c.b16 %v500, %v498
        %v517 = vpack.c.b16 %v501, %v499
        %534 = vmatprep.subr.bf16.mxu0 %v517
        %535 = vmatpush1.bf16.msra.mxu0 %v516
        %536 = vmatprep.subr.bf16.mxu0 %v515
        %537 = vmatpush1.bf16.msra.mxu0 %v514
        %538 = vmatprep.subr.bf16.mxu0 %v513
        %539 = vmatpush1.bf16.msra.mxu0 %v512
        %540 = vmatprep.subr.bf16.mxu0 %v511
        %541 = vmatpush1.bf16.msra.mxu0 %v510
        %542 = vmatprep.subr.bf16.mxu0 %v509
        %543 = vmatpush1.bf16.msra.mxu0 %v508
        %544 = vmatprep.subr.bf16.mxu0 %v507
        %545 = vmatpush1.bf16.msra.mxu0 %v506
        %546 = vmatprep.subr.bf16.mxu0 %v505
        %547 = vmatpush1.bf16.msra.mxu0 %v504
        %548 = vmatprep.subr.bf16.mxu0 %v503
        %549 = vmatpush1.bf16.msra.mxu0 %v502
        %550 = vmatprep.subr.bf16.mxu0 0
        %551 = vmatpush2.bf16.msra.mxu0 0
        %552 = vmatprep.subr.bf16.mxu0 0
        %553 = vmatpush2.bf16.msra.mxu0 0
        %554 = vmatprep.subr.bf16.mxu0 0
        %555 = vmatpush2.bf16.msra.mxu0 0
        %556 = vmatprep.subr.bf16.mxu0 0
        %557 = vmatpush2.bf16.msra.mxu0 0
        %558 = vmatprep.subr.bf16.mxu0 0
        %559 = vmatpush2.bf16.msra.mxu0 0
        %560 = vmatprep.subr.bf16.mxu0 0
        %561 = vmatpush2.bf16.msra.mxu0 0
        %562 = vmatprep.subr.bf16.mxu0 0
        %563 = vmatpush2.bf16.msra.mxu0 0
        %564 = vmatprep.subr.bf16.mxu0 0
        %565 = vmatpush2.bf16.msra.mxu0 0
        %566 = vmatprep.mubr.bf16.mxu0 0
        %567 = vmatmul.mubr.bf16.gmra.mxu0 %v426
        %v568 = vpop.f32.mrf.mxu0
        %v569 = vadd.f32 %v447, %v568
        %v570 = vpop.f32.mrf.mxu0
        %v571 = vadd.f32 %v451, %v570
        %v572 = vpop.f32.mrf.mxu0
        %v573 = vpop.f32.mrf.mxu0
        %574 = vdwg.mxu0
        %v575 = vadd.f32 %v569, %v571
        %576 = vadd.xlane.f32.xlu0 %v575
        %v577 = vpop.xlane.xlu0 %576
        %v578 = vrcp.pop 256.0
        %v579 = vmul.f32 %v577, %v578
        %v580 = vmul.f32 %v569, %v569
        %v581 = vmul.f32 %v571, %v571
        %v582 = vadd.f32 %v580, %v581
        %583 = vadd.xlane.f32.xlu0 %v582
        %v584 = vpop.xlane.xlu0 %583
        %v585 = vmul.f32 %v584, %v578
        %v586 = vmul.f32 %v579, %v579
        %v587 = vsub.f32 %v585, %v586
        %v588 = vadd.f32 %v587, 1e-05
        %v589 = vrsqrt.pop %v588
        %v590 = vsub.f32 %v569, %v579
        %v591 = vsub.f32 %v571, %v579
        %v592 = vmul.f32 %v590, %v589
        %v593 = vmul.f32 %v591, %v589
        %v595 = vlaneseq
        %v596 = vshrl.u32 %v595, 7
        %v597 = vsub.s32 0, %v596
        %v598 = vrot.slane %v340, %v597
        %v599 = vlaneseq
        %v600 = vshrl.u32 %v599, 7
        %v601 = vsub.s32 1, %v600
        %v602 = vrot.slane %v340, %v601
        %v605 = vmul.f32 %v592, %v598
        %v606 = vmul.f32 %v593, %v602
        %v608 = vlaneseq
        %v609 = vshrl.u32 %v608, 7
        %v610 = vsub.s32 0, %v609
        %v611 = vrot.slane %v342, %v610
        %v612 = vlaneseq
        %v613 = vshrl.u32 %v612, 7
        %v614 = vsub.s32 1, %v613
        %v615 = vrot.slane %v342, %v614
        %v618 = vadd.f32 %v605, %v611
        %v619 = vadd.f32 %v606, %v615
        %vm620 = vcmp.gt.f32.partialorder %v618, 0.0
        %vm621 = vcmp.gt.f32.partialorder %v619, 0.0
        %v622 = vmul.f32 %v618, 0.2
        %v623 = vmul.f32 %v619, 0.2
        %v624 = vsel %vm620, %v618, %v622
        %v625 = vsel %vm621, %v619, %v623
        %v626 = vpack.c.bf16 %v624, %v624
        %v627 = vpack.c.bf16 %v625, %v625
        %v628 = vld [vmem:[#allocation4] sm:$0xff]
        %v629 = vld [vmem:[#allocation4 + $0x8] sm:$0xff]
        %v630 = vld [vmem:[#allocation4 + $0x10] sm:$0xff]
        %v631 = vld [vmem:[#allocation4 + $0x18] sm:$0xff]
        %v632 = vld [vmem:[#allocation4 + $0x20] sm:$0xff]
        %v633 = vld [vmem:[#allocation4 + $0x28] sm:$0xff]
        %v634 = vld [vmem:[#allocation4 + $0x30] sm:$0xff]
        %v635 = vld [vmem:[#allocation4 + $0x38] sm:$0xff]
        %v636 = vld [vmem:[#allocation4 + $0x40] sm:$0xff]
        %v637 = vld [vmem:[#allocation4 + $0x48] sm:$0xff]
        %v638 = vld [vmem:[#allocation4 + $0x50] sm:$0xff]
        %v639 = vld [vmem:[#allocation4 + $0x58] sm:$0xff]
        %v640 = vld [vmem:[#allocation4 + $0x60] sm:$0xff]
        %v641 = vld [vmem:[#allocation4 + $0x68] sm:$0xff]
        %v642 = vld [vmem:[#allocation4 + $0x70] sm:$0xff]
        %v643 = vld [vmem:[#allocation4 + $0x78] sm:$0xff]
        %v644 = vld [vmem:[#allocation4 + $0x80] sm:$0xff]
        %v645 = vld [vmem:[#allocation4 + $0x88] sm:$0xff]
        %v646 = vld [vmem:[#allocation4 + $0x90] sm:$0xff]
        %v647 = vld [vmem:[#allocation4 + $0x98] sm:$0xff]
        %v648 = vld [vmem:[#allocation4 + $0xa0] sm:$0xff]
        %v649 = vld [vmem:[#allocation4 + $0xa8] sm:$0xff]
        %v650 = vld [vmem:[#allocation4 + $0xb0] sm:$0xff]
        %v651 = vld [vmem:[#allocation4 + $0xb8] sm:$0xff]
        %v652 = vld [vmem:[#allocation4 + $0xc0] sm:$0xff]
        %v653 = vld [vmem:[#allocation4 + $0xc8] sm:$0xff]
        %v654 = vld [vmem:[#allocation4 + $0xd0] sm:$0xff]
        %v655 = vld [vmem:[#allocation4 + $0xd8] sm:$0xff]
        %v656 = vld [vmem:[#allocation4 + $0xe0] sm:$0xff]
        %v657 = vld [vmem:[#allocation4 + $0xe8] sm:$0xff]
        %v658 = vld [vmem:[#allocation4 + $0xf0] sm:$0xff]
        %v659 = vld [vmem:[#allocation4 + $0xf8] sm:$0xff]
        %v661 = vlaneseq
        %v662 = vshrl.u32 %v661, 7
        %v663 = vsub.s32 0, %v662
        %v664 = vrot.slane %v344, %v663
        %v665 = vlaneseq
        %v666 = vshrl.u32 %v665, 7
        %v667 = vsub.s32 1, %v666
        %v668 = vrot.slane %v344, %v667
        %v703 = vunpack.c.l.b16 %v628
        %v704 = vunpack.c.h.b16 %v628
        %v705 = vunpack.c.l.b16 %v629
        %v706 = vunpack.c.h.b16 %v629
        %v707 = vunpack.c.l.b16 %v630
        %v708 = vunpack.c.h.b16 %v630
        %v709 = vunpack.c.l.b16 %v631
        %v710 = vunpack.c.h.b16 %v631
        %v711 = vunpack.c.l.b16 %v632
        %v712 = vunpack.c.h.b16 %v632
        %v713 = vunpack.c.l.b16 %v633
        %v714 = vunpack.c.h.b16 %v633
        %v715 = vunpack.c.l.b16 %v634
        %v716 = vunpack.c.h.b16 %v634
        %v717 = vunpack.c.l.b16 %v635
        %v718 = vunpack.c.h.b16 %v635
        %v719 = vunpack.c.l.b16 %v636
        %v720 = vunpack.c.h.b16 %v636
        %v721 = vunpack.c.l.b16 %v637
        %v722 = vunpack.c.h.b16 %v637
        %v723 = vunpack.c.l.b16 %v638
        %v724 = vunpack.c.h.b16 %v638
        %v725 = vunpack.c.l.b16 %v639
        %v726 = vunpack.c.h.b16 %v639
        %v727 = vunpack.c.l.b16 %v640
        %v728 = vunpack.c.h.b16 %v640
        %v729 = vunpack.c.l.b16 %v641
        %v730 = vunpack.c.h.b16 %v641
        %v731 = vunpack.c.l.b16 %v642
        %v732 = vunpack.c.h.b16 %v642
        %v733 = vunpack.c.l.b16 %v643
        %v734 = vunpack.c.h.b16 %v643
        %v735 = vunpack.c.l.b16 %v644
        %v736 = vunpack.c.h.b16 %v644
        %v737 = vunpack.c.l.b16 %v645
        %v738 = vunpack.c.h.b16 %v645
        %v739 = vunpack.c.l.b16 %v646
        %v740 = vunpack.c.h.b16 %v646
        %v741 = vunpack.c.l.b16 %v647
        %v742 = vunpack.c.h.b16 %v647
        %v743 = vunpack.c.l.b16 %v648
        %v744 = vunpack.c.h.b16 %v648
        %v745 = vunpack.c.l.b16 %v649
        %v746 = vunpack.c.h.b16 %v649
        %v747 = vunpack.c.l.b16 %v650
        %v748 = vunpack.c.h.b16 %v650
        %v749 = vunpack.c.l.b16 %v651
        %v750 = vunpack.c.h.b16 %v651
        %v751 = vunpack.c.l.b16 %v652
        %v752 = vunpack.c.h.b16 %v652
        %v753 = vunpack.c.l.b16 %v653
        %v754 = vunpack.c.h.b16 %v653
        %v755 = vunpack.c.l.b16 %v654
        %v756 = vunpack.c.h.b16 %v654
        %v757 = vunpack.c.l.b16 %v655
        %v758 = vunpack.c.h.b16 %v655
        %v759 = vunpack.c.l.b16 %v656
        %v760 = vunpack.c.h.b16 %v656
        %v761 = vunpack.c.l.b16 %v657
        %v762 = vunpack.c.h.b16 %v657
        %v763 = vunpack.c.l.b16 %v658
        %v764 = vunpack.c.h.b16 %v658
        %v765 = vunpack.c.l.b16 %v659
        %v766 = vunpack.c.h.b16 %v659
        %v767 = vpack.c.b16 %v705, %v703
        %v768 = vpack.c.b16 %v706, %v704
        %v769 = vpack.c.b16 %v709, %v707
        %v770 = vpack.c.b16 %v710, %v708
        %v771 = vpack.c.b16 %v713, %v711
        %v772 = vpack.c.b16 %v714, %v712
        %v773 = vpack.c.b16 %v717, %v715
        %v774 = vpack.c.b16 %v718, %v716
        %v775 = vpack.c.b16 %v721, %v719
        %v776 = vpack.c.b16 %v722, %v720
        %v777 = vpack.c.b16 %v725, %v723
        %v778 = vpack.c.b16 %v726, %v724
        %v779 = vpack.c.b16 %v729, %v727
        %v780 = vpack.c.b16 %v730, %v728
        %v781 = vpack.c.b16 %v733, %v731
        %v782 = vpack.c.b16 %v734, %v732
        %v783 = vpack.c.b16 %v737, %v735
        %v784 = vpack.c.b16 %v738, %v736
        %v785 = vpack.c.b16 %v741, %v739
        %v786 = vpack.c.b16 %v742, %v740
        %v787 = vpack.c.b16 %v745, %v743
        %v788 = vpack.c.b16 %v746, %v744
        %v789 = vpack.c.b16 %v749, %v747
        %v790 = vpack.c.b16 %v750, %v748
        %v791 = vpack.c.b16 %v753, %v751
        %v792 = vpack.c.b16 %v754, %v752
        %v793 = vpack.c.b16 %v757, %v755
        %v794 = vpack.c.b16 %v758, %v756
        %v795 = vpack.c.b16 %v761, %v759
        %v796 = vpack.c.b16 %v762, %v760
        %v797 = vpack.c.b16 %v765, %v763
        %v798 = vpack.c.b16 %v766, %v764
        %831 = vmatprep.subr.bf16.mxu0 %v782
        %832 = vmatpush1.bf16.msra.mxu0 %v781
        %833 = vmatprep.subr.bf16.mxu0 %v780
        %834 = vmatpush1.bf16.msra.mxu0 %v779
        %835 = vmatprep.subr.bf16.mxu0 %v778
        %836 = vmatpush1.bf16.msra.mxu0 %v777
        %837 = vmatprep.subr.bf16.mxu0 %v776
        %838 = vmatpush1.bf16.msra.mxu0 %v775
        %839 = vmatprep.subr.bf16.mxu0 %v774
        %840 = vmatpush1.bf16.msra.mxu0 %v773
        %841 = vmatprep.subr.bf16.mxu0 %v772
        %842 = vmatpush1.bf16.msra.mxu0 %v771
        %843 = vmatprep.subr.bf16.mxu0 %v770
        %844 = vmatpush1.bf16.msra.mxu0 %v769
        %845 = vmatprep.subr.bf16.mxu0 %v768
        %846 = vmatpush1.bf16.msra.mxu0 %v767
        %847 = vmatprep.subr.bf16.mxu0 %v798
        %848 = vmatpush2.bf16.msra.mxu0 %v797
        %849 = vmatprep.subr.bf16.mxu0 %v796
        %850 = vmatpush2.bf16.msra.mxu0 %v795
        %851 = vmatprep.subr.bf16.mxu0 %v794
        %852 = vmatpush2.bf16.msra.mxu0 %v793
        %853 = vmatprep.subr.bf16.mxu0 %v792
        %854 = vmatpush2.bf16.msra.mxu0 %v791
        %855 = vmatprep.subr.bf16.mxu0 %v790
        %856 = vmatpush2.bf16.msra.mxu0 %v789
        %857 = vmatprep.subr.bf16.mxu0 %v788
        %858 = vmatpush2.bf16.msra.mxu0 %v787
        %859 = vmatprep.subr.bf16.mxu0 %v786
        %860 = vmatpush2.bf16.msra.mxu0 %v785
        %861 = vmatprep.subr.bf16.mxu0 %v784
        %862 = vmatpush2.bf16.msra.mxu0 %v783
        %863 = vmatprep.mubr.bf16.mxu0 %v627
        %864 = vmatmul.mubr.bf16.gmra.mxu0 %v626
        %v865 = vpop.f32.mrf.mxu0
        %v866 = vadd.f32 %v664, %v865
        %v867 = vpop.f32.mrf.mxu0
        %v868 = vadd.f32 %v668, %v867
        %v869 = vpop.f32.mrf.mxu0
        %v870 = vpop.f32.mrf.mxu0
        %871 = vdwg.mxu0
        %v872 = vadd.f32 %v866, %v868
        %873 = vadd.xlane.f32.xlu0 %v872
        %v874 = vpop.xlane.xlu0 %873
        %v875 = vmul.f32 %v874, %v578
        %v876 = vmul.f32 %v866, %v866
        %v877 = vmul.f32 %v868, %v868
        %v878 = vadd.f32 %v876, %v877
        %879 = vadd.xlane.f32.xlu0 %v878
        %v880 = vpop.xlane.xlu0 %879
        %v881 = vmul.f32 %v880, %v578
        %v882 = vmul.f32 %v875, %v875
        %v883 = vsub.f32 %v881, %v882
        %v884 = vadd.f32 %v883, 1e-05
        %v885 = vrsqrt.pop %v884
        %v886 = vsub.f32 %v866, %v875
        %v887 = vsub.f32 %v868, %v875
        %v888 = vmul.f32 %v886, %v885
        %v889 = vmul.f32 %v887, %v885
        %v891 = vlaneseq
        %v892 = vshrl.u32 %v891, 7
        %v893 = vsub.s32 0, %v892
        %v894 = vrot.slane %v346, %v893
        %v895 = vlaneseq
        %v896 = vshrl.u32 %v895, 7
        %v897 = vsub.s32 1, %v896
        %v898 = vrot.slane %v346, %v897
        %v901 = vmul.f32 %v888, %v894
        %v902 = vmul.f32 %v889, %v898
        %v904 = vlaneseq
        %v905 = vshrl.u32 %v904, 7
        %v906 = vsub.s32 0, %v905
        %v907 = vrot.slane %v348, %v906
        %v908 = vlaneseq
        %v909 = vshrl.u32 %v908, 7
        %v910 = vsub.s32 1, %v909
        %v911 = vrot.slane %v348, %v910
        %v914 = vadd.f32 %v901, %v907
        %v915 = vadd.f32 %v902, %v911
        %vm916 = vcmp.gt.f32.partialorder %v914, 0.0
        %vm917 = vcmp.gt.f32.partialorder %v915, 0.0
        %v918 = vmul.f32 %v914, 0.2
        %v919 = vmul.f32 %v915, 0.2
        %v920 = vsel %vm916, %v914, %v918
        %v921 = vsel %vm917, %v915, %v919
        %v922 = vpack.c.bf16 %v920, %v920
        %v923 = vpack.c.bf16 %v921, %v921
        %v924 = vld [vmem:[#allocation6] sm:$0xf]
        %v925 = vld [vmem:[#allocation6 + $0x4] sm:$0xf]
        %v926 = vld [vmem:[#allocation6 + $0x8] sm:$0xf]
        %v927 = vld [vmem:[#allocation6 + $0xc] sm:$0xf]
        %v928 = vld [vmem:[#allocation6 + $0x10] sm:$0xf]
        %v929 = vld [vmem:[#allocation6 + $0x14] sm:$0xf]
        %v930 = vld [vmem:[#allocation6 + $0x18] sm:$0xf]
        %v931 = vld [vmem:[#allocation6 + $0x1c] sm:$0xf]
        %v932 = vld [vmem:[#allocation6 + $0x20] sm:$0xf]
        %v933 = vld [vmem:[#allocation6 + $0x24] sm:$0xf]
        %v934 = vld [vmem:[#allocation6 + $0x28] sm:$0xf]
        %v935 = vld [vmem:[#allocation6 + $0x2c] sm:$0xf]
        %v936 = vld [vmem:[#allocation6 + $0x30] sm:$0xf]
        %v937 = vld [vmem:[#allocation6 + $0x34] sm:$0xf]
        %v938 = vld [vmem:[#allocation6 + $0x38] sm:$0xf]
        %v939 = vld [vmem:[#allocation6 + $0x3c] sm:$0xf]
        %v940 = vld [vmem:[#allocation6 + $0x40] sm:$0xf]
        %v941 = vld [vmem:[#allocation6 + $0x44] sm:$0xf]
        %v942 = vld [vmem:[#allocation6 + $0x48] sm:$0xf]
        %v943 = vld [vmem:[#allocation6 + $0x4c] sm:$0xf]
        %v944 = vld [vmem:[#allocation6 + $0x50] sm:$0xf]
        %v945 = vld [vmem:[#allocation6 + $0x54] sm:$0xf]
        %v946 = vld [vmem:[#allocation6 + $0x58] sm:$0xf]
        %v947 = vld [vmem:[#allocation6 + $0x5c] sm:$0xf]
        %v948 = vld [vmem:[#allocation6 + $0x60] sm:$0xf]
        %v949 = vld [vmem:[#allocation6 + $0x64] sm:$0xf]
        %v950 = vld [vmem:[#allocation6 + $0x68] sm:$0xf]
        %v951 = vld [vmem:[#allocation6 + $0x6c] sm:$0xf]
        %v952 = vld [vmem:[#allocation6 + $0x70] sm:$0xf]
        %v953 = vld [vmem:[#allocation6 + $0x74] sm:$0xf]
        %v954 = vld [vmem:[#allocation6 + $0x78] sm:$0xf]
        %v955 = vld [vmem:[#allocation6 + $0x7c] sm:$0xf]
        %v988 = vunpack.c.l.b16 %v924
        %v989 = vunpack.c.l.b16 %v925
        %v990 = vunpack.c.l.b16 %v926
        %v991 = vunpack.c.l.b16 %v927
        %v992 = vunpack.c.l.b16 %v928
        %v993 = vunpack.c.l.b16 %v929
        %v994 = vunpack.c.l.b16 %v930
        %v995 = vunpack.c.l.b16 %v931
        %v996 = vunpack.c.l.b16 %v932
        %v997 = vunpack.c.l.b16 %v933
        %v998 = vunpack.c.l.b16 %v934
        %v999 = vunpack.c.l.b16 %v935
        %v1000 = vunpack.c.l.b16 %v936
        %v1001 = vunpack.c.l.b16 %v937
        %v1002 = vunpack.c.l.b16 %v938
        %v1003 = vunpack.c.l.b16 %v939
        %v1004 = vunpack.c.l.b16 %v940
        %v1005 = vunpack.c.l.b16 %v941
        %v1006 = vunpack.c.l.b16 %v942
        %v1007 = vunpack.c.l.b16 %v943
        %v1008 = vunpack.c.l.b16 %v944
        %v1009 = vunpack.c.l.b16 %v945
        %v1010 = vunpack.c.l.b16 %v946
        %v1011 = vunpack.c.l.b16 %v947
        %v1012 = vunpack.c.l.b16 %v948
        %v1013 = vunpack.c.l.b16 %v949
        %v1014 = vunpack.c.l.b16 %v950
        %v1015 = vunpack.c.l.b16 %v951
        %v1016 = vunpack.c.l.b16 %v952
        %v1017 = vunpack.c.l.b16 %v953
        %v1018 = vunpack.c.l.b16 %v954
        %v1019 = vunpack.c.l.b16 %v955
        %v1020 = vpack.c.b16 %v989, %v988
        %v1021 = vpack.c.b16 %v991, %v990
        %v1022 = vpack.c.b16 %v993, %v992
        %v1023 = vpack.c.b16 %v995, %v994
        %v1024 = vpack.c.b16 %v997, %v996
        %v1025 = vpack.c.b16 %v999, %v998
        %v1026 = vpack.c.b16 %v1001, %v1000
        %v1027 = vpack.c.b16 %v1003, %v1002
        %v1028 = vpack.c.b16 %v1005, %v1004
        %v1029 = vpack.c.b16 %v1007, %v1006
        %v1030 = vpack.c.b16 %v1009, %v1008
        %v1031 = vpack.c.b16 %v1011, %v1010
        %v1032 = vpack.c.b16 %v1013, %v1012
        %v1033 = vpack.c.b16 %v1015, %v1014
        %v1034 = vpack.c.b16 %v1017, %v1016
        %v1035 = vpack.c.b16 %v1019, %v1018
        %1052 = vmatprep.subr.bf16.mxu0 0
        %1053 = vmatpush1.bf16.msra.mxu0 %v1027
        %1054 = vmatprep.subr.bf16.mxu0 0
        %1055 = vmatpush1.bf16.msra.mxu0 %v1026
        %1056 = vmatprep.subr.bf16.mxu0 0
        %1057 = vmatpush1.bf16.msra.mxu0 %v1025
        %1058 = vmatprep.subr.bf16.mxu0 0
        %1059 = vmatpush1.bf16.msra.mxu0 %v1024
        %1060 = vmatprep.subr.bf16.mxu0 0
        %1061 = vmatpush1.bf16.msra.mxu0 %v1023
        %1062 = vmatprep.subr.bf16.mxu0 0
        %1063 = vmatpush1.bf16.msra.mxu0 %v1022
        %1064 = vmatprep.subr.bf16.mxu0 0
        %1065 = vmatpush1.bf16.msra.mxu0 %v1021
        %1066 = vmatprep.subr.bf16.mxu0 0
        %1067 = vmatpush1.bf16.msra.mxu0 %v1020
        %1068 = vmatprep.subr.bf16.mxu0 0
        %1069 = vmatpush2.bf16.msra.mxu0 %v1035
        %1070 = vmatprep.subr.bf16.mxu0 0
        %1071 = vmatpush2.bf16.msra.mxu0 %v1034
        %1072 = vmatprep.subr.bf16.mxu0 0
        %1073 = vmatpush2.bf16.msra.mxu0 %v1033
        %1074 = vmatprep.subr.bf16.mxu0 0
        %1075 = vmatpush2.bf16.msra.mxu0 %v1032
        %1076 = vmatprep.subr.bf16.mxu0 0
        %1077 = vmatpush2.bf16.msra.mxu0 %v1031
        %1078 = vmatprep.subr.bf16.mxu0 0
        %1079 = vmatpush2.bf16.msra.mxu0 %v1030
        %1080 = vmatprep.subr.bf16.mxu0 0
        %1081 = vmatpush2.bf16.msra.mxu0 %v1029
        %1082 = vmatprep.subr.bf16.mxu0 0
        %1083 = vmatpush2.bf16.msra.mxu0 %v1028
        %1084 = vmatprep.mubr.bf16.mxu0 %v923
        %1085 = vmatmul.mubr.bf16.gmra.mxu0 %v922
        %v1086 = vpop.f32.mrf.mxu0
        %v1087 = vadd.f32 %v349, %v1086
        %v1088 = vpop.f32.mrf.mxu0
        %v1089 = vpop.f32.mrf.mxu0
        %v1090 = vpop.f32.mrf.mxu0
        %1091 = vdwg.mxu0
        %1092 = vadd.xlane.f32.xlu0 %v1087
        %v1093 = vpop.xlane.xlu0 %1092
        %v1094 = vmul.f32 %v1093, %v409
        %v1095 = vmul.f32 %v1087, %v1087
        %1096 = vadd.xlane.f32.xlu0 %v1095
        %v1097 = vpop.xlane.xlu0 %1096
        %v1098 = vmul.f32 %v1097, %v409
        %v1099 = vmul.f32 %v1094, %v1094
        %v1100 = vsub.f32 %v1098, %v1099
        %v1101 = vadd.f32 %v1100, 1e-05
        %v1102 = vrsqrt.pop %v1101
        %v1103 = vsub.f32 %v1087, %v1094
        %v1104 = vmul.f32 %v1103, %v1102
        %v1105 = vmul.f32 %v1104, %v350
        %v1106 = vadd.f32 %v1105, %v351
        %vm1107 = vcmp.gt.f32.partialorder %v1106, 0.0
        %v1108 = vmul.f32 %v1106, 0.2
        %v1109 = vsel %vm1107, %v1106, %v1108
        %v1110 = vpack.c.bf16 %v1109, %v1109
        %v1111 = vld [vmem:[%s5] sm:$0xf]
        %v1112 = vld [vmem:[%s5 + $0x4] sm:$0xf]
        %v1113 = vld [vmem:[%s5 + $0x8] sm:$0xf]
        %v1114 = vld [vmem:[%s5 + $0xc] sm:$0xf]
        %v1115 = vld [vmem:[%s5 + $0x10] sm:$0xf]
        %v1116 = vld [vmem:[%s5 + $0x14] sm:$0xf]
        %v1117 = vld [vmem:[%s5 + $0x18] sm:$0xf]
        %v1118 = vld [vmem:[%s5 + $0x1c] sm:$0xf]
        %v1119 = vld [vmem:[%s5 + $0x20] sm:$0xf]
        %v1120 = vld [vmem:[%s5 + $0x24] sm:$0xf]
        %v1121 = vld [vmem:[%s5 + $0x28] sm:$0xf]
        %v1122 = vld [vmem:[%s5 + $0x2c] sm:$0xf]
        %v1123 = vld [vmem:[%s5 + $0x30] sm:$0xf]
        %v1124 = vld [vmem:[%s5 + $0x34] sm:$0xf]
        %v1125 = vld [vmem:[%s5 + $0x38] sm:$0xf]
        %v1126 = vld [vmem:[%s5 + $0x3c] sm:$0xf]
        %v1143 = vunpack.c.l.b16 %v1111
        %v1144 = vunpack.c.l.b16 %v1112
        %v1145 = vunpack.c.l.b16 %v1113
        %v1146 = vunpack.c.l.b16 %v1114
        %v1147 = vunpack.c.l.b16 %v1115
        %v1148 = vunpack.c.l.b16 %v1116
        %v1149 = vunpack.c.l.b16 %v1117
        %v1150 = vunpack.c.l.b16 %v1118
        %v1151 = vunpack.c.l.b16 %v1119
        %v1152 = vunpack.c.l.b16 %v1120
        %v1153 = vunpack.c.l.b16 %v1121
        %v1154 = vunpack.c.l.b16 %v1122
        %v1155 = vunpack.c.l.b16 %v1123
        %v1156 = vunpack.c.l.b16 %v1124
        %v1157 = vunpack.c.l.b16 %v1125
        %v1158 = vunpack.c.l.b16 %v1126
        %v1159 = vpack.c.b16 %v1144, %v1143
        %v1160 = vpack.c.b16 %v1146, %v1145
        %v1161 = vpack.c.b16 %v1148, %v1147
        %v1162 = vpack.c.b16 %v1150, %v1149
        %v1163 = vpack.c.b16 %v1152, %v1151
        %v1164 = vpack.c.b16 %v1154, %v1153
        %v1165 = vpack.c.b16 %v1156, %v1155
        %v1166 = vpack.c.b16 %v1158, %v1157
        %1175 = vmatprep.subr.bf16.mxu0 0
        %1176 = vmatpush1.bf16.msra.mxu0 %v1166
        %1177 = vmatprep.subr.bf16.mxu0 0
        %1178 = vmatpush1.bf16.msra.mxu0 %v1165
        %1179 = vmatprep.subr.bf16.mxu0 0
        %1180 = vmatpush1.bf16.msra.mxu0 %v1164
        %1181 = vmatprep.subr.bf16.mxu0 0
        %1182 = vmatpush1.bf16.msra.mxu0 %v1163
        %1183 = vmatprep.subr.bf16.mxu0 0
        %1184 = vmatpush1.bf16.msra.mxu0 %v1162
        %1185 = vmatprep.subr.bf16.mxu0 0
        %1186 = vmatpush1.bf16.msra.mxu0 %v1161
        %1187 = vmatprep.subr.bf16.mxu0 0
        %1188 = vmatpush1.bf16.msra.mxu0 %v1160
        %1189 = vmatprep.subr.bf16.mxu0 0
        %1190 = vmatpush1.bf16.msra.mxu0 %v1159
        %1191 = vmatprep.subr.bf16.mxu0 0
        %1192 = vmatpush2.bf16.msra.mxu0 0
        %1193 = vmatprep.subr.bf16.mxu0 0
        %1194 = vmatpush2.bf16.msra.mxu0 0
        %1195 = vmatprep.subr.bf16.mxu0 0
        %1196 = vmatpush2.bf16.msra.mxu0 0
        %1197 = vmatprep.subr.bf16.mxu0 0
        %1198 = vmatpush2.bf16.msra.mxu0 0
        %1199 = vmatprep.subr.bf16.mxu0 0
        %1200 = vmatpush2.bf16.msra.mxu0 0
        %1201 = vmatprep.subr.bf16.mxu0 0
        %1202 = vmatpush2.bf16.msra.mxu0 0
        %1203 = vmatprep.subr.bf16.mxu0 0
        %1204 = vmatpush2.bf16.msra.mxu0 0
        %1205 = vmatprep.subr.bf16.mxu0 0
        %1206 = vmatpush2.bf16.msra.mxu0 0
        %1207 = vmatprep.mubr.bf16.mxu0 0
        %1208 = vmatmul.mubr.bf16.gmra.mxu0 %v1110
        %v1209 = vpop.f32.mrf.mxu0
        %v1210 = vadd.f32 %v352, %v1209
        %v1211 = vpop.f32.mrf.mxu0
        %v1212 = vpop.f32.mrf.mxu0
        %v1213 = vpop.f32.mrf.mxu0
        %1214 = vdwg.mxu0
        %1215 = vst [vmem:[%s332] sm:$0xff] %v1210
        %p1216 = scmp.lt.s32.totalorder %s21, 1
        %s1217 = scalar_select %p1216, %s21, 1
        %s1218 = smul.addr %s1217, 8
        %s1219 = scalar_lea.vmem %s7, %s1218
        // Predicated region
        $region65: #{generator_forward.1} parent=47 // pred_check
          %p1220 = pneg %p191
        $region66: #{generator_forward.1} parent=47 // pred_check_branch
          %1222 = sbr.rel (%p1220) target = $region68
        $region67: #{generator_forward.1} parent=47 // pred_region
          _
        $region68: #{generator_forward.1} parent=47 // pred_fallthru
          _
      $region48: #{generator_forward.1} parent=5 // pred_fallthru
        _
      %p1223 = scmp.le.s32.totalorder 2, %s16
      // Predicated region
      $region69: #{generator_forward.1} parent=5 // pred_check
        %p1224 = pneg %p1223
      $region70: #{generator_forward.1} parent=5 // pred_check_branch
        %1226 = sbr.rel (%p1224) target = $region72
      $region71: #{generator_forward.1} parent=5 // pred_region
        %s1227 = ssub.s32 %s16, 2
        // Predicated region
        $region73: #{generator_forward.1} parent=71 // pred_check
          %p1228 = pneg %p197
        $region74: #{generator_forward.1} parent=71 // pred_check_branch
          %1230 = sbr.rel (%p1228) target = $region76
        $region75: #{generator_forward.1} parent=71 // pred_region
          %p1231 = scmp.lt.s32.totalorder %s22, 1
          %s1232 = scalar_select %p1231, %s22, 1
          %s1233 = smul.addr %s1232, 8
          %s1234 = scalar_lea.vmem %s7, %s1233
        $region76: #{generator_forward.1} parent=71 // pred_fallthru
          _
      $region72: #{generator_forward.1} parent=5 // pred_fallthru
        _
    $region6: #{generator_forward.1} parent=1 // loop_footer
      %s20 = sadd.s32 1, %s16
    $region7: #{generator_forward.1} parent=1 // loop_footer_branch
      %15 = sbr.rel target = $region3
    $region8: #{generator_forward.1} parent=1 // loop_exit
      _
    %1235 = vsyncpa [#allocation3], 1
    %s1236 = scalar_lea.sflag [#allocation3], 1
    %1237 = vsyncpa %s1236, 1
    %1238 = vsyncpa [#allocation5], 1
    %1239 = vsyncpa [#allocation8], 1

</llo_original>
